<compile_context>
chip_gen: v7x
topology: tpu7x:2x2x1
jax: 0.10.0
libtpu: 0.0.40
codegen_flags: <defaults>
</compile_context>

<pallas_src>
import jax
import jax.numpy as jnp
from jax.experimental import pallas as pl
from jax.experimental.pallas import tpu as pltpu

_LANE = 128
_SUBLANE = 8
# Conservative: stays under the 32 MiB scoped VMEM default on v5e/v6e/v7x.
_VMEM_BUDGET = 28 * 1024 * 1024
_W_RESIDENT_CAP = 16 * 1024 * 1024  # counts W as double-buffered


def _round_up(x, m):
    return (x + m - 1) // m * m


def _pick_tile(dim, target, align):
    """Largest `align`-multiple tile <= target dividing `dim` (dim % align == 0)."""
    if dim <= target:
        return dim
    t = (target // align) * align
    while t > align:
        if dim % t == 0:
            return t
        t -= align
    return align


def _synapse_kernel_resident(pre_ref, post_ref, w_ref, out_ref):
    """No reduction axis: one fused matmul, result finished in registers."""
    a = jnp.clip(pre_ref[...], 0.0, 1.0).astype(w_ref.dtype)      # VPU clamp (+cast)
    r = jnp.dot(a, w_ref[...], preferred_element_type=jnp.float32)  # (tb, 2*tp)
    tp = out_ref.shape[1]
    left = r[:, :tp]                                              # a @ (G*E)^T
    gsum = r[:, tp:]                                              # a @ G^T
    out_ref[...] = (left - post_ref[...].astype(jnp.float32) * gsum
                    ).astype(out_ref.dtype)


def _synapse_kernel_tiled(pre_ref, post_ref, w_ref, out_ref, acc_ref):
    """3-D grid (B-tiles, post-tiles, pre/reduction-tiles) with f32 accumulator."""
    k = pl.program_id(2)
    a = jnp.clip(pre_ref[...], 0.0, 1.0).astype(w_ref.dtype)
    part = jnp.dot(a, w_ref[...], preferred_element_type=jnp.float32)  # (tb, 2*tp)

    @pl.when(k == 0)
    def _():
        acc_ref[...] = part          # no zero-init + RMW pass

    @pl.when(k > 0)
    def _():
        acc_ref[...] += part

    @pl.when(k == pl.num_programs(2) - 1)
    def _():
        tp = out_ref.shape[1]
        r = acc_ref[...]
        out_ref[...] = (r[:, :tp] - post_ref[...].astype(jnp.float32) * r[:, tp:]
                        ).astype(out_ref.dtype)


def make_synapse_forward(conductance, reversal, *, weight_dtype=jnp.bfloat16,
                         tb_target=256, tp_target=256, tk_target=1024,
                         vmem_budget_bytes=_VMEM_BUDGET):
    """Build a forward(state_pre, state_post) closure.

    The fused, pre-transposed, zero-padded weight slab [ (G*E)^T | G^T ] is
    computed ONCE here (weights are static across forward calls).
    conductance, reversal: (size_post, size_pre)
    """
    size_post, size_pre = conductance.shape
    pp_pre = _round_up(size_pre, _LANE)
    pp_post = _round_up(size_post, _LANE)
    w_bytes = jnp.dtype(weight_dtype).itemsize

    # Resident-W path if the (double-buffer-counted) slab fits comfortably.
    resident = (2 * pp_pre * 2 * pp_post * w_bytes
                <= min(vmem_budget_bytes // 2, _W_RESIDENT_CAP))
    if resident:
        tp, tk = pp_post, pp_pre
    else:
        tp = _pick_tile(pp_post, tp_target, _LANE)
        tk = _pick_tile(pp_pre, tk_target, _LANE)

    # Fused slab, interleaved per post-tile so each (tk, 2*tp) block is
    # [ (G*E)^T tile_j | G^T tile_j ].  Zero padding keeps padded rows/cols inert.
    pad_w = ((0, pp_pre - size_pre), (0, pp_post - size_post))
    ge_t = jnp.pad((conductance * reversal).T.astype(weight_dtype), pad_w)
    g_t = jnp.pad(conductance.T.astype(weight_dtype), pad_w)
    nj = pp_post // tp
    w_fused = jnp.concatenate(
        [ge_t.reshape(pp_pre, nj, tp), g_t.reshape(pp_pre, nj, tp)],
        axis=-1).reshape(pp_pre, 2 * pp_post)

    def forward(state_pre, state_post):
        squeeze = state_pre.ndim == 1
        if squeeze:
            # 1-D path in PyTorch broadcasts identically to a batch of 1.
            state_pre = state_pre[None, :]
            state_post = state_post[None, :]

        B = state_pre.shape[0]
        out_dtype = state_pre.dtype
        in_bytes = jnp.dtype(state_pre.dtype).itemsize
        out_bytes = jnp.dtype(out_dtype).itemsize
        padded_B = _round_up(B, _SUBLANE)

        if padded_B != B or pp_pre != size_pre:
            state_pre = jnp.pad(state_pre,
                                ((0, padded_B - B), (0, pp_pre - size_pre)))
        if padded_B != B or pp_post != size_post:
            state_post = jnp.pad(state_post,
                                 ((0, padded_B - B), (0, pp_post - size_post)))

        # Batch tile: largest that keeps the per-step VMEM footprint in budget.
        tgt = tb_target
        while True:
            tb = _pick_tile(padded_B, tgt, _SUBLANE)
            est = (2 * tk * 2 * tp * w_bytes          # W block(s), double-buffered
                   + 2 * tb * tk * in_bytes           # state_pre blocks
                   + 2 * tb * tp * in_bytes           # state_post blocks
                   + 2 * tb * tp * out_bytes          # out blocks
                   + tb * 2 * tp * 4)                 # f32 accumulator / result
            if est <= vmem_budget_bytes or tgt <= _SUBLANE:
                break
            tgt //= 2
        # Give the second TensorCore (v7x megacore) work when B allows it.
        if (padded_B // tb == 1 and padded_B >= 2 * _SUBLANE
                and (padded_B // 2) % _SUBLANE == 0):
            tb = padded_B // 2
        nb = padded_B // tb

        if resident:
            grid = (nb,)
            kernel = _synapse_kernel_resident
            in_specs = [
                pl.BlockSpec((tb, pp_pre), lambda i: (i, 0)),          # state_pre
                pl.BlockSpec((tb, pp_post), lambda i: (i, 0)),         # state_post
                pl.BlockSpec((pp_pre, 2 * pp_post), lambda i: (0, 0)),  # W: DMA'd once
            ]
            out_specs = pl.BlockSpec((tb, pp_post), lambda i: (i, 0))
            scratch = []
            dims = ("parallel",)
        else:
            grid = (nb, pp_post // tp, pp_pre // tk)
            kernel = _synapse_kernel_tiled
            in_specs = [
                pl.BlockSpec((tb, tk), lambda i, j, k: (i, k)),        # state_pre
                pl.BlockSpec((tb, tp), lambda i, j, k: (i, j)),        # state_post
                pl.BlockSpec((tk, 2 * tp), lambda i, j, k: (k, j)),    # fused [GE^T|G^T]
            ]
            out_specs = pl.BlockSpec((tb, tp), lambda i, j, k: (i, j))
            scratch = [pltpu.VMEM((tb, 2 * tp), jnp.float32)]
            dims = ("parallel", "parallel", "arbitrary")

        out = pl.pallas_call(
            kernel,
            out_shape=jax.ShapeDtypeStruct((padded_B, pp_post), out_dtype),
            grid_spec=pltpu.PrefetchScalarGridSpec(
                num_scalar_prefetch=0,
                grid=grid,
                in_specs=in_specs,
                out_specs=out_specs,
                scratch_shapes=scratch),
            compiler_params=pltpu.CompilerParams(dimension_semantics=dims),
        )(state_pre, state_post, w_fused)

        out = out[:B, :size_post]
        return out[0] if squeeze else out

    return jax.jit(forward)


def reference_forward(state_pre, state_post, conductance, reversal):
    """Pure-JAX reference mirroring the PyTorch module line by line."""
    a = jnp.clip(state_pre, 0.0, 1.0)
    if state_pre.ndim > 1:
        cond = conductance * a[:, None, :]
    else:
        cond = conductance * a
    if cond.ndim > 2:
        left = jnp.sum(cond * reversal, axis=2)
        right = state_post * jnp.sum(cond, axis=2)
    else:
        left = jnp.sum(cond * reversal, axis=1)
        right = state_post * jnp.sum(cond, axis=1)
    return left - right


if __name__ == "__main__":
    key = jax.random.PRNGKey(0)

    def make_params(k, pre, post):
        k1, k2 = jax.random.split(k)
        cond = (1.0 / pre) * jax.random.uniform(k1, (post, pre), dtype=jnp.float32)
        rev = 4.0 * jax.random.uniform(k2, (post, pre), dtype=jnp.float32) - 2.0
        return cond, rev

    # --- Test 1: module-scale shapes, bf16 weights, resident path, post<128 padding ---
    B, pre, post = 8, 64, 32
    k1, k2, k3, key = jax.random.split(key, 4)
    cond, rev = make_params(k1, pre, post)
    sp = 2.0 * jax.random.normal(k2, (B, pre), dtype=jnp.float32)
    spo = 2.0 * jax.random.normal(k3, (B, post), dtype=jnp.float32)
    ref = reference_forward(sp, spo, cond, rev)

    fwd_bf16 = make_synapse_forward(cond, rev, weight_dtype=jnp.bfloat16)
    out = jax.block_until_ready(fwd_bf16(sp, spo))
    assert out.shape == (B, post)
    assert jnp.allclose(out, ref, atol=5e-2, rtol=5e-2), (
        float(jnp.max(jnp.abs(out - ref))))

    # --- Test 1b: same module with f32 weights (exact-path check) ---
    fwd_f32 = make_synapse_forward(cond, rev, weight_dtype=jnp.float32)
    out32 = jax.block_until_ready(fwd_f32(sp, spo))
    assert jnp.allclose(out32, ref, atol=1e-5, rtol=1e-5), (
        float(jnp.max(jnp.abs(out32 - ref))))

    # --- Test 2: 1-D (unbatched) path ---
    k4, k5, key = jax.random.split(key, 3)
    sp1 = 2.0 * jax.random.normal(k4, (pre,), dtype=jnp.float32)
    spo1 = 2.0 * jax.random.normal(k5, (post,), dtype=jnp.float32)
    out1 = jax.block_until_ready(fwd_f32(sp1, spo1))
    ref1 = reference_forward(sp1, spo1, cond, rev)
    assert out1.shape == (post,)
    assert jnp.allclose(out1, ref1, atol=1e-5, rtol=1e-5), (
        float(jnp.max(jnp.abs(out1 - ref1))))

    # --- Test 3: tiled 3-D grid path with a real reduction axis (forced via a
    #     tiny VMEM budget so the resident path is rejected) ---
    B3, pre3, post3 = 16, 512, 256
    k6, k7, k8, key = jax.random.split(key, 4)
    cond3, rev3 = make_params(k6, pre3, post3)
    sp3 = 2.0 * jax.random.normal(k7, (B3, pre3), dtype=jnp.float32)
    spo3 = 2.0 * jax.random.normal(k8, (B3, post3), dtype=jnp.float32)
    fwd3 = make_synapse_forward(cond3, rev3, weight_dtype=jnp.float32,
                                tp_target=128, tk_target=128,
                                vmem_budget_bytes=1 * 1024 * 1024)
    out3 = jax.block_until_ready(fwd3(sp3, spo3))
    ref3 = reference_forward(sp3, spo3, cond3, rev3)
    assert out3.shape == (B3, post3)
    assert jnp.allclose(out3, ref3, atol=1e-4, rtol=1e-4), (
        float(jnp.max(jnp.abs(out3 - ref3))))

    print("KERNEL_OK")
</pallas_src>

<mosaic_0001>
module attributes {stable_mosaic.version = 11 : i64} {
  func.func @_synapse_kernel_resident(%arg0: i32, %arg1: memref<8x128xf32, #tpu.memory_space<vmem>>, %arg2: memref<8x128xf32, #tpu.memory_space<vmem>>, %arg3: memref<128x256xbf16, #tpu.memory_space<vmem>>, %arg4: memref<8x128xf32, #tpu.memory_space<vmem>>) attributes {dimension_semantics = [#tpu.dimension_semantics<parallel>], iteration_bounds = array<i64: 1>, scalar_prefetch = 0 : i64, scratch_operands = 0 : i64, tpu.core_type = #tpu.core_type<tc>, window_params = [{transform_indices = @transform_0, window_bounds = array<i64: 8, 128>}, {transform_indices = @transform_1, window_bounds = array<i64: 8, 128>}, {pipeline_mode = #tpu.pipeline_mode<synchronous>, transform_indices = @transform_2, window_bounds = array<i64: 128, 256>}, {transform_indices = @transform_3, window_bounds = array<i64: 8, 128>}]} {
    %c0 = arith.constant 0 : index
    %c0_0 = arith.constant 0 : index
    %0 = vector.load %arg1[%c0, %c0_0] : memref<8x128xf32, #tpu.memory_space<vmem>>, vector<8x128xf32>
    %cst = arith.constant 0.000000e+00 : f32
    %cst_1 = arith.constant 1.000000e+00 : f32
    %1 = vector.broadcast %cst : f32 to vector<8x128xf32>
    %2 = arith.maximumf %1, %0 : vector<8x128xf32>
    %3 = vector.broadcast %cst_1 : f32 to vector<8x128xf32>
    %4 = arith.minimumf %3, %2 : vector<8x128xf32>
    %5 = arith.truncf %4 : vector<8x128xf32> to vector<8x128xbf16>
    %c0_2 = arith.constant 0 : index
    %c0_3 = arith.constant 0 : index
    %6 = vector.load %arg3[%c0_2, %c0_3] : memref<128x256xbf16, #tpu.memory_space<vmem>>, vector<128x256xbf16>
    %cst_4 = arith.constant dense<0.000000e+00> : vector<8x256xf32>
    %7 = tpu.matmul %5, %6, %cst_4 {dimension_numbers = #tpu.dot_dimension_numbers<[1], [0], [0], [1], [0, 0, 1, 1], [], []>} : vector<8x128xbf16>, vector<128x256xbf16>, vector<8x256xf32> -> vector<8x256xf32>
    %8 = vector.extract_strided_slice %7 {offsets = [0, 0], sizes = [8, 128], strides = [1, 1]} : vector<8x256xf32> to vector<8x128xf32>
    %9 = vector.extract_strided_slice %7 {offsets = [0, 128], sizes = [8, 128], strides = [1, 1]} : vector<8x256xf32> to vector<8x128xf32>
    %c0_5 = arith.constant 0 : index
    %c0_6 = arith.constant 0 : index
    %10 = vector.load %arg2[%c0_5, %c0_6] : memref<8x128xf32, #tpu.memory_space<vmem>>, vector<8x128xf32>
    %11 = arith.mulf %10, %9 : vector<8x128xf32>
    %12 = arith.subf %8, %11 : vector<8x128xf32>
    %c0_7 = arith.constant 0 : index
    %c0_8 = arith.constant 0 : index
    %13 = vector.load %arg4[%c0_7, %c0_8] : memref<8x128xf32, #tpu.memory_space<vmem>>, vector<8x128xf32>
    tpu.vector_store %arg4[%c0_7, %c0_8], %12 {strides = array<i32>} : memref<8x128xf32, #tpu.memory_space<vmem>>, vector<8x128xf32>,
    return
  }
  func.func @transform_0(%arg0: i32) -> (i32, i32) {
    %c0_i32 = arith.constant 0 : i32
    %c0_i32_0 = arith.constant 0 : i32
    return %arg0, %c0_i32 : i32, i32
  }
  func.func @transform_1(%arg0: i32) -> (i32, i32) {
    %c0_i32 = arith.constant 0 : i32
    %c0_i32_0 = arith.constant 0 : i32
    return %arg0, %c0_i32 : i32, i32
  }
  func.func @transform_2(%arg0: i32) -> (i32, i32) {
    %c0_i32 = arith.constant 0 : i32
    %c0_i32_0 = arith.constant 0 : i32
    %c0_i32_1 = arith.constant 0 : i32
    return %c0_i32, %c0_i32_0 : i32, i32
  }
  func.func @transform_3(%arg0: i32) -> (i32, i32) {
    %c0_i32 = arith.constant 0 : i32
    %c0_i32_0 = arith.constant 0 : i32
    return %arg0, %c0_i32 : i32, i32
  }
}

</mosaic_0001>

<llo_original>
// kernel: forward.1
$region0: #{forward.1}
  #allocation0 [shape = 'u32[]', space=smem, size = 0x4, offset = 0x4, fixed_abs, tag = 'smem constant byte address 0x4 - core index']
  #allocation1 [shape = 'u32[144,128]{1,0:T(1,128)}', space=vmem, size = 0x12000, scoped, tag = 'internal scratch']
  %s0 = inlined_call_operand.vmem [shape: f32[8,128], index: 0, kind: input, shape index: {}]
  %s1 = inlined_call_operand.vmem [shape: f32[8,128], index: 1, kind: input, shape index: {}]
  %s2 = inlined_call_operand.vmem [shape: bf16[128,256], index: 2, kind: input, shape index: {}]
  %s3 = inlined_call_operand.hbm [shape: f32[8,128], index: 3, kind: output, shape index: {}]
  %s4 = sld [smem:[#allocation0]]
  $region22: #{forward.1} parent=0
    _
  %s6 = ssub.s32 1, %s4
  %s7 = scalar_select 0, %s6, %s4
  $region1: #{forward.1} parent=0
    #allocation2 [shape = 'u8[4096]{0}', space=vmem, size = 0x1000, scoped, tag = 'output window, operand 0, single buffered']
    #allocation3 [shape = 's32[1]{0}', space=sflag, size = 0x4, scoped, tag = 'scoped memory for forward.1']
    %8 = vsyncpa [#allocation3], 0
    // Predicated region
    $region2: #{forward.1} parent=1 // pred_check
      _
    $region3: #{forward.1} parent=1 // pred_check_branch
      %10 = sbr.rel (0) target = $region5
    $region4: #{forward.1} parent=1 // pred_region
      _
    $region5: #{forward.1} parent=1 // pred_fallthru
      _
    // Predicated region
    $region6: #{forward.1} parent=1 // pred_check
      _
    $region7: #{forward.1} parent=1 // pred_check_branch
      %12 = sbr.rel (0) target = $region9
    $region8: #{forward.1} parent=1 // pred_region
      _
    $region9: #{forward.1} parent=1 // pred_fallthru
      _
    // Predicated region
    $region10: #{forward.1} parent=1 // pred_check
      _
    $region11: #{forward.1} parent=1 // pred_check_branch
      %14 = sbr.rel (0) target = $region13
    $region12: #{forward.1} parent=1 // pred_region
      _
    $region13: #{forward.1} parent=1 // pred_fallthru
      _
    %v16 = vld [vmem:[%s0] sm:$0xff]
    %v17 = vmax.f32 %v16, 0.0
    %v18 = vmin.f32 %v17, 1.0
    %v19 = vpack.c.bf16 %v18, %v18
    %v20 = vld [vmem:[%s2] sm:$0xff]
    %v21 = vld [vmem:[%s2 + $0x8] sm:$0xff]
    %v22 = vld [vmem:[%s2 + $0x10] sm:$0xff]
    %v23 = vld [vmem:[%s2 + $0x18] sm:$0xff]
    %v24 = vld [vmem:[%s2 + $0x20] sm:$0xff]
    %v25 = vld [vmem:[%s2 + $0x28] sm:$0xff]
    %v26 = vld [vmem:[%s2 + $0x30] sm:$0xff]
    %v27 = vld [vmem:[%s2 + $0x38] sm:$0xff]
    %v28 = vld [vmem:[%s2 + $0x40] sm:$0xff]
    %v29 = vld [vmem:[%s2 + $0x48] sm:$0xff]
    %v30 = vld [vmem:[%s2 + $0x50] sm:$0xff]
    %v31 = vld [vmem:[%s2 + $0x58] sm:$0xff]
    %v32 = vld [vmem:[%s2 + $0x60] sm:$0xff]
    %v33 = vld [vmem:[%s2 + $0x68] sm:$0xff]
    %v34 = vld [vmem:[%s2 + $0x70] sm:$0xff]
    %v35 = vld [vmem:[%s2 + $0x78] sm:$0xff]
    %v52 = vunpack.c.l.b16 %v20
    %v53 = vunpack.c.h.b16 %v20
    %v54 = vunpack.c.l.b16 %v21
    %v55 = vunpack.c.h.b16 %v21
    %v56 = vunpack.c.l.b16 %v22
    %v57 = vunpack.c.h.b16 %v22
    %v58 = vunpack.c.l.b16 %v23
    %v59 = vunpack.c.h.b16 %v23
    %v60 = vunpack.c.l.b16 %v24
    %v61 = vunpack.c.h.b16 %v24
    %v62 = vunpack.c.l.b16 %v25
    %v63 = vunpack.c.h.b16 %v25
    %v64 = vunpack.c.l.b16 %v26
    %v65 = vunpack.c.h.b16 %v26
    %v66 = vunpack.c.l.b16 %v27
    %v67 = vunpack.c.h.b16 %v27
    %v68 = vunpack.c.l.b16 %v28
    %v69 = vunpack.c.h.b16 %v28
    %v70 = vunpack.c.l.b16 %v29
    %v71 = vunpack.c.h.b16 %v29
    %v72 = vunpack.c.l.b16 %v30
    %v73 = vunpack.c.h.b16 %v30
    %v74 = vunpack.c.l.b16 %v31
    %v75 = vunpack.c.h.b16 %v31
    %v76 = vunpack.c.l.b16 %v32
    %v77 = vunpack.c.h.b16 %v32
    %v78 = vunpack.c.l.b16 %v33
    %v79 = vunpack.c.h.b16 %v33
    %v80 = vunpack.c.l.b16 %v34
    %v81 = vunpack.c.h.b16 %v34
    %v82 = vunpack.c.l.b16 %v35
    %v83 = vunpack.c.h.b16 %v35
    %v84 = vpack.c.b16 %v54, %v52
    %v85 = vpack.c.b16 %v55, %v53
    %v86 = vpack.c.b16 %v58, %v56
    %v87 = vpack.c.b16 %v59, %v57
    %v88 = vpack.c.b16 %v62, %v60
    %v89 = vpack.c.b16 %v63, %v61
    %v90 = vpack.c.b16 %v66, %v64
    %v91 = vpack.c.b16 %v67, %v65
    %v92 = vpack.c.b16 %v70, %v68
    %v93 = vpack.c.b16 %v71, %v69
    %v94 = vpack.c.b16 %v74, %v72
    %v95 = vpack.c.b16 %v75, %v73
    %v96 = vpack.c.b16 %v78, %v76
    %v97 = vpack.c.b16 %v79, %v77
    %v98 = vpack.c.b16 %v82, %v80
    %v99 = vpack.c.b16 %v83, %v81
    %116 = vmatprep.subr.bf16.mxu0 %v85
    %117 = vmatpush1.bf16.msra.mxu0 %v84
    %118 = vmatprep.subr.bf16.mxu0 %v87
    %119 = vmatpush1.bf16.msra.mxu0 %v86
    %120 = vmatprep.subr.bf16.mxu0 %v89
    %121 = vmatpush1.bf16.msra.mxu0 %v88
    %122 = vmatprep.subr.bf16.mxu0 %v91
    %123 = vmatpush1.bf16.msra.mxu0 %v90
    %124 = vmatprep.subr.bf16.mxu0 %v93
    %125 = vmatpush1.bf16.msra.mxu0 %v92
    %126 = vmatprep.subr.bf16.mxu0 %v95
    %127 = vmatpush1.bf16.msra.mxu0 %v94
    %128 = vmatprep.subr.bf16.mxu0 %v97
    %129 = vmatpush1.bf16.msra.mxu0 %v96
    %130 = vmatprep.subr.bf16.mxu0 %v99
    %131 = vmatpush1.bf16.msra.mxu0 %v98
    %132 = vmatprep.subr.bf16.mxu0 0
    %133 = vmatpush1.bf16.msra.mxu0 0
    %134 = vmatprep.subr.bf16.mxu0 0
    %135 = vmatpush1.bf16.msra.mxu0 0
    %136 = vmatprep.subr.bf16.mxu0 0
    %137 = vmatpush1.bf16.msra.mxu0 0
    %138 = vmatprep.subr.bf16.mxu0 0
    %139 = vmatpush1.bf16.msra.mxu0 0
    %140 = vmatprep.subr.bf16.mxu0 0
    %141 = vmatpush1.bf16.msra.mxu0 0
    %142 = vmatprep.subr.bf16.mxu0 0
    %143 = vmatpush1.bf16.msra.mxu0 0
    %144 = vmatprep.subr.bf16.mxu0 0
    %145 = vmatpush1.bf16.msra.mxu0 0
    %146 = vmatprep.subr.bf16.mxu0 0
    %147 = vmatpush1.bf16.msra.mxu0 0
    %148 = vmatprep.mubr.bf16.mxu0 0
    %149 = vmatmul.mubr.bf16.gmra.mrb[0].mxu0 %v19
    %v150 = vpop.f32.mrb[0].mxu0
    %v151 = vadd.f32 0.0, %v150
    %v152 = vpop.f32.mrb[0].mxu0
    %v153 = vadd.f32 0.0, %v152
    %v154 = vpop.f32.mrb[0].mxu0
    %v155 = vpop.f32.mrb[0].mxu0
    %156 = vdwg.mxu0
    %v157 = vld [vmem:[%s1] sm:$0xff]
    %v158 = vmul.f32 %v157, %v153
    %v159 = vsub.f32 %v151, %v158
    %160 = vst [vmem:[#allocation2] sm:$0xff] %v159
    // Predicated region
    $region14: #{forward.1} parent=1 // pred_check
      _
    $region15: #{forward.1} parent=1 // pred_check_branch
      %162 = sbr.rel (0) target = $region17
    $region16: #{forward.1} parent=1 // pred_region
      %s164 = ssub.s32 128, 128
      %165 = vsyncadd [#allocation3], %s164
      %s167 = sshll.u32 [#allocation2], 4
      %s168 = int_to_ptr.vmem [resolvable:$true] %s167
      %170 = dma.vmem_to_hbm [thread:$0]  %s168, 128, %s3, [#allocation3]
    $region17: #{forward.1} parent=1 // pred_fallthru
      _
    // Predicated region
    $region18: #{forward.1} parent=1 // pred_check
      _
    $region19: #{forward.1} parent=1 // pred_check_branch
      %172 = sbr.rel (0) target = $region21
    $region20: #{forward.1} parent=1 // pred_region
      %173 = dma.done [#allocation3], 128
    $region21: #{forward.1} parent=1 // pred_fallthru
      _
    %174 = vsyncpa [#allocation3], 1

</llo_original>
